<compile_context>
chip_gen: v7x
topology: tpu7x:2x2x1
jax: 0.10.0
libtpu: 0.0.40
codegen_flags: <defaults>
</compile_context>

<pallas_src>
import functools

import jax
import jax.numpy as jnp
from jax import lax
from jax.experimental import pallas as pl
from jax.experimental.pallas import tpu as pltpu

_LANES = 128
_TARGET_BLOCK_BYTES = 2 << 20   # ~2 MiB per block buffer
_MIN_GRID_BLOCKS = 4            # pipelining + both v7x TensorCores
_GOLDEN = -1640531527           # 0x9E3779B9 as int32


def _slab_layout(n: int, itemsize: int):
    """Pick a lane-dense 2-D slab and row-block size.

    Returns (cols, rows, block_rows, padded_n) such that:
      * cols is a multiple of 128 (as wide as divisibility allows),
      * block_rows is sublane-aligned (or equals the full rows dim),
      * block bytes ~ 2 MiB, and the grid has >= _MIN_GRID_BLOCKS steps when
        the tensor is large enough (partial last blocks are fine: Pallas masks
        edge stores).
    """
    cols = None
    for c in (1024, 512, 256, _LANES):
        if n % c == 0:
            cols = c
            break
    if cols is None:                    # ragged: pad up to a 128-wide slab
        cols = _LANES
        rows = pl.cdiv(n, cols)
    else:
        rows = n // cols
    padded_n = rows * cols

    # Sublane alignment: 8 rows for f32, 16 for bf16, 32 for int8.
    row_align = max(8, 32 // itemsize)
    tgt = max(row_align,
              (_TARGET_BLOCK_BYTES // (cols * itemsize)) // row_align * row_align)

    if rows >= 2 * row_align:
        nblk = min(_MIN_GRID_BLOCKS, rows // row_align)
        cap = max(row_align, (rows // nblk) // row_align * row_align)
        block_rows = min(tgt, cap)
    else:
        block_rows = rows               # tiny input: single full-slab block

    return cols, rows, block_rows, padded_n


def _hash_bits(seed, gidx):
    """Fallback uniform bits over [0, 2^31) via a lowbias32-style hash.

    Only used when the default backend is not TPU (interpret / CPU), where the
    hardware PRNG primitives have no lowering.
    """
    h = gidx + seed * jnp.int32(_GOLDEN)
    h = h ^ lax.shift_right_logical(h, 16)
    h = h * jnp.int32(0x7FEB352D)
    h = h ^ lax.shift_right_logical(h, 15)
    h = h * jnp.int32(-2073269621)      # 0x846CA68B
    h = h ^ lax.shift_right_logical(h, 16)
    return h & jnp.int32(0x7FFFFFFF)


def _dropout_train_kernel(seed_ref, x_ref, o_ref, *, thresh_i31, use_hw_prng):
    x = x_ref[...]
    if use_hw_prng:
        # Distinct, order-independent stream per grid block.
        pltpu.prng_seed(seed_ref[0] + pl.program_id(0) * jnp.int32(_GOLDEN))
        bits = pltpu.prng_random_bits(x_ref.shape)
        if bits.dtype != jnp.int32:
            bits = pltpu.bitcast(bits, jnp.int32)
        r = bits & jnp.int32(0x7FFFFFFF)          # uniform over [0, 2^31)
    else:
        rows, cols = x_ref.shape
        row = lax.broadcasted_iota(jnp.int32, (rows, cols), 0)
        col = lax.broadcasted_iota(jnp.int32, (rows, cols), 1)
        gidx = (pl.program_id(0) * jnp.int32(rows * cols)
                + row * jnp.int32(cols) + col)
        r = _hash_bits(seed_ref[0], gidx)
    drop = r < jnp.int32(thresh_i31)              # True w.p. drop_rate
    o_ref[...] = jnp.where(drop, jnp.zeros_like(x), x)


def _dropout_eval_kernel(x_ref, o_ref, *, scale):
    x = x_ref[...]
    o_ref[...] = x * jnp.asarray(scale, dtype=x.dtype)


class Dropout:
    """Pallas port of the PyTorch Dropout module."""

    def __init__(self, drop_rate: float):
        self.drop_rate = float(drop_rate)
        self.training = True

    def __call__(self, x, seed: int = 0):
        if self.training:
            if self.drop_rate <= 0.0:
                return x
            if self.drop_rate >= 1.0:
                return jnp.zeros_like(x)

        n = x.size
        itemsize = jnp.dtype(x.dtype).itemsize
        cols, rows, block_rows, padded_n = _slab_layout(n, itemsize)

        flat = x.reshape(-1)
        if padded_n != n:               # ragged tail only; no pad when aligned
            flat = jnp.pad(flat, (0, padded_n - n))
        slab = flat.reshape(rows, cols)

        grid = (pl.cdiv(rows, block_rows),)
        blk = (block_rows, cols)
        cparams = pltpu.CompilerParams(dimension_semantics=("parallel",))

        if self.training:
            # P(drop) = thresh / 2^31, exact to 2^-31 (no float quantization).
            thresh = int(round(self.drop_rate * 2147483648.0))
            thresh = max(0, min(thresh, 2**31 - 1))
            use_hw_prng = jax.default_backend() == "tpu"
            seed_arr = jnp.asarray([seed], dtype=jnp.int32)
            out_slab = pl.pallas_call(
                functools.partial(_dropout_train_kernel,
                                  thresh_i31=thresh,
                                  use_hw_prng=use_hw_prng),
                out_shape=jax.ShapeDtypeStruct(slab.shape, slab.dtype),
                grid_spec=pltpu.PrefetchScalarGridSpec(
                    num_scalar_prefetch=1,
                    grid=grid,
                    in_specs=[pl.BlockSpec(blk, lambda i, seed: (i, 0))],
                    out_specs=pl.BlockSpec(blk, lambda i, seed: (i, 0)),
                ),
                compiler_params=cparams,
            )(seed_arr, slab)
        else:
            denom = 1.0 - self.drop_rate
            scale = float("inf") if denom == 0.0 else 1.0 / denom
            out_slab = pl.pallas_call(
                functools.partial(_dropout_eval_kernel, scale=scale),
                out_shape=jax.ShapeDtypeStruct(slab.shape, slab.dtype),
                grid_spec=pltpu.PrefetchScalarGridSpec(
                    num_scalar_prefetch=0,
                    grid=grid,
                    in_specs=[pl.BlockSpec(blk, lambda i: (i, 0))],
                    out_specs=pl.BlockSpec(blk, lambda i: (i, 0)),
                ),
                compiler_params=cparams,
            )(slab)

        if padded_n != n:
            return out_slab.reshape(-1)[:n].reshape(x.shape)
        return out_slab.reshape(x.shape)


if __name__ == "__main__":
    key = jax.random.PRNGKey(0)
    x = jax.random.normal(key, (2, 4, 16, 16), dtype=jnp.float32)  # NCHW
    drop_rate = 0.2

    layer = Dropout(drop_rate)

    # --- training mode: bernoulli mask, masked elements zeroed, no rescale ---
    layer.training = True
    y_train = layer(x, seed=1234)
    y_train = jax.block_until_ready(y_train)
    keep = y_train != 0.0
    assert bool(jnp.all(jnp.where(keep, y_train == x, True)))
    frac_dropped = float(jnp.mean((y_train == 0.0).astype(jnp.float32)))
    assert 0.05 < frac_dropped < 0.5, f"unexpected drop fraction {frac_dropped}"

    # --- multi-block grid path (pipelined / both v7x cores) ---
    x_big = jax.random.normal(jax.random.PRNGKey(1), (4, 8, 32, 32),
                              dtype=jnp.float32)
    y_big = jax.block_until_ready(layer(x_big, seed=7))
    keep_b = y_big != 0.0
    assert bool(jnp.all(jnp.where(keep_b, y_big == x_big, True)))
    frac_b = float(jnp.mean((y_big == 0.0).astype(jnp.float32)))
    assert 0.05 < frac_b < 0.5, f"unexpected drop fraction {frac_b}"

    # --- ragged element count (pad path) ---
    x_rag = jax.random.normal(jax.random.PRNGKey(2), (3, 5, 7),
                              dtype=jnp.float32)
    y_rag = jax.block_until_ready(layer(x_rag, seed=3))
    assert y_rag.shape == x_rag.shape
    keep_r = y_rag != 0.0
    assert bool(jnp.all(jnp.where(keep_r, y_rag == x_rag, True)))

    # --- eval mode: X / (1 - drop_rate) ---
    layer.training = False
    y_eval = layer(x)
    y_eval = jax.block_until_ready(y_eval)
    assert jnp.allclose(y_eval, x / (1.0 - drop_rate), rtol=1e-6, atol=1e-6)

    print("KERNEL_OK")
</pallas_src>

<mosaic_0001>
module attributes {stable_mosaic.version = 11 : i64} {
  func.func @_dropout_train_kernel(%arg0: i32, %arg1: memref<1xi32, #tpu.memory_space<smem>>, %arg2: memref<2x1024xf32, #tpu.memory_space<vmem>>, %arg3: memref<2x1024xf32, #tpu.memory_space<vmem>>) attributes {dimension_semantics = [#tpu.dimension_semantics<parallel>], iteration_bounds = array<i64: 1>, scalar_prefetch = 1 : i64, scratch_operands = 0 : i64, tpu.core_type = #tpu.core_type<tc>, window_params = [{transform_indices = @transform_0, window_bounds = array<i64: 2, 1024>}, {transform_indices = @transform_1, window_bounds = array<i64: 2, 1024>}]} {
    %c0 = arith.constant 0 : index
    %c0_0 = arith.constant 0 : index
    %0 = vector.load %arg2[%c0, %c0_0] : memref<2x1024xf32, #tpu.memory_space<vmem>>, vector<2x1024xf32>
    %1 = tpu.iota {dimensions = array<i32: 0>} : vector<2x1024xi32>
    %2 = tpu.iota {dimensions = array<i32: 1>} : vector<2x1024xi32>
    %c2048_i32 = arith.constant 2048 : i32
    %3 = arith.muli %arg0, %c2048_i32 : i32
    %c1024_i32 = arith.constant 1024 : i32
    %4 = vector.broadcast %c1024_i32 : i32 to vector<2x1024xi32>
    %5 = arith.muli %1, %4 : vector<2x1024xi32>
    %6 = vector.broadcast %3 : i32 to vector<2x1024xi32>
    %7 = arith.addi %6, %5 : vector<2x1024xi32>
    %8 = arith.addi %7, %2 : vector<2x1024xi32>
    %c0_1 = arith.constant 0 : index
    %9 = memref.load %arg1[%c0_1] : memref<1xi32, #tpu.memory_space<smem>>
    %c-1640531527_i32 = arith.constant -1640531527 : i32
    %10 = arith.muli %9, %c-1640531527_i32 : i32
    %11 = vector.broadcast %10 : i32 to vector<2x1024xi32>
    %12 = arith.addi %8, %11 : vector<2x1024xi32>
    %c16_i32 = arith.constant 16 : i32
    %13 = vector.broadcast %c16_i32 : i32 to vector<2x1024xi32>
    %14 = arith.shrui %12, %13 : vector<2x1024xi32>
    %15 = arith.xori %12, %14 : vector<2x1024xi32>
    %c2146121005_i32 = arith.constant 2146121005 : i32
    %16 = vector.broadcast %c2146121005_i32 : i32 to vector<2x1024xi32>
    %17 = arith.muli %15, %16 : vector<2x1024xi32>
    %c15_i32 = arith.constant 15 : i32
    %18 = vector.broadcast %c15_i32 : i32 to vector<2x1024xi32>
    %19 = arith.shrui %17, %18 : vector<2x1024xi32>
    %20 = arith.xori %17, %19 : vector<2x1024xi32>
    %c-2073269621_i32 = arith.constant -2073269621 : i32
    %21 = vector.broadcast %c-2073269621_i32 : i32 to vector<2x1024xi32>
    %22 = arith.muli %20, %21 : vector<2x1024xi32>
    %c16_i32_2 = arith.constant 16 : i32
    %23 = vector.broadcast %c16_i32_2 : i32 to vector<2x1024xi32>
    %24 = arith.shrui %22, %23 : vector<2x1024xi32>
    %25 = arith.xori %22, %24 : vector<2x1024xi32>
    %c2147483647_i32 = arith.constant 2147483647 : i32
    %26 = vector.broadcast %c2147483647_i32 : i32 to vector<2x1024xi32>
    %27 = arith.andi %25, %26 : vector<2x1024xi32>
    %c429496730_i32 = arith.constant 429496730 : i32
    %28 = vector.broadcast %c429496730_i32 : i32 to vector<2x1024xi32>
    %29 = arith.cmpi slt, %27, %28 : vector<2x1024xi32>
    %cst = arith.constant 0.000000e+00 : f32
    %30 = vector.broadcast %cst : f32 to vector<2x1024xf32>
    %31 = arith.select %29, %30, %0 : vector<2x1024xi1>, vector<2x1024xf32>
    %c0_3 = arith.constant 0 : index
    %c0_4 = arith.constant 0 : index
    %32 = vector.load %arg3[%c0_3, %c0_4] : memref<2x1024xf32, #tpu.memory_space<vmem>>, vector<2x1024xf32>
    tpu.vector_store %arg3[%c0_3, %c0_4], %31 {strides = array<i32>} : memref<2x1024xf32, #tpu.memory_space<vmem>>, vector<2x1024xf32>,
    return
  }
  func.func @transform_0(%arg0: i32, %arg1: memref<1xi32, #tpu.memory_space<smem>>) -> (i32, i32) {
    %c0_i32 = arith.constant 0 : i32
    %c0_i32_0 = arith.constant 0 : i32
    return %arg0, %c0_i32 : i32, i32
  }
  func.func @transform_1(%arg0: i32, %arg1: memref<1xi32, #tpu.memory_space<smem>>) -> (i32, i32) {
    %c0_i32 = arith.constant 0 : i32
    %c0_i32_0 = arith.constant 0 : i32
    return %arg0, %c0_i32 : i32, i32
  }
}

</mosaic_0001>

<llo_original>
// kernel: tpu_custom_call.1
$region0: #{tpu_custom_call.1}
  #allocation0 [shape = 'u32[]', space=smem, size = 0x4, offset = 0x4, fixed_abs, tag = 'smem constant byte address 0x4 - core index']
  #allocation1 [shape = 'u32[144,128]{1,0:T(1,128)}', space=vmem, size = 0x12000, scoped, tag = 'internal scratch']
  #allocation2 [shape = 's32[1]{0}', space=sflag, size = 0x4, scoped, tag = 'scoped memory for tpu_custom_call.1']
  #allocation3 [shape = 's32[1]{0:T(128)S(6)}', space=smem, size = 0x200, scoped, tag = 'prefetched SMEM operand 0']
  %s0 = inlined_call_operand.<no memory space> [shape: s32[1], index: 0, kind: input, shape index: {}]
  %s1 = inlined_call_operand.hbm [shape: f32[2,1024], index: 1, kind: input, shape index: {}]
  %s2 = inlined_call_operand.hbm [shape: f32[2,1024], index: 2, kind: output, shape index: {}]
  %s3 = sld [smem:[#allocation0]]
  $region18: #{tpu_custom_call.1} parent=0
    _
  %s5 = ssub.s32 1, %s3
  %s6 = scalar_select 0, %s5, %s3
  %7 = sst [smem:[#allocation3]] %s0
  $region1: #{tpu_custom_call.1} parent=0
    #allocation4 [shape = 'u8[8192]{0}', space=vmem, size = 0x2000, scoped, tag = 'input window, operand 1, single buffered']
    #allocation5 [shape = 's32[1]{0}', space=sflag, size = 0x4, scoped, tag = 'scoped memory for tpu_custom_call.1']
    #allocation6 [shape = 's32[1]{0}', space=sflag, size = 0x4, scoped, tag = 'scoped memory for tpu_custom_call.1']
    #allocation7 [shape = 'u8[8192]{0}', space=vmem, size = 0x2000, scoped, tag = 'output window, operand 0, single buffered']
    %8 = vsyncpa [#allocation5], 0
    %9 = vsyncpa [#allocation6], 0
    // Predicated region
    $region2: #{tpu_custom_call.1} parent=1 // pred_check
      _
    $region3: #{tpu_custom_call.1} parent=1 // pred_check_branch
      %11 = sbr.rel (0) target = $region5
    $region4: #{tpu_custom_call.1} parent=1 // pred_region
      %s13 = ssub.s32 256, 256
      %14 = vsyncadd [#allocation5], %s13
      %s16 = sshll.u32 [#allocation4], 4
      %s17 = int_to_ptr.vmem [resolvable:$true] %s16
      %19 = dma.hbm_to_vmem [thread:$0]  %s1, 256, %s17, [#allocation5]
    $region5: #{tpu_custom_call.1} parent=1 // pred_fallthru
      _
    // Predicated region
    $region6: #{tpu_custom_call.1} parent=1 // pred_check
      _
    $region7: #{tpu_custom_call.1} parent=1 // pred_check_branch
      %21 = sbr.rel (0) target = $region9
    $region8: #{tpu_custom_call.1} parent=1 // pred_region
      %22 = dma.done [#allocation5], 256
    $region9: #{tpu_custom_call.1} parent=1 // pred_fallthru
      _
    %v23 = vld [vmem:[#allocation4] sm:$0xff]
    %v24 = vld [vmem:[#allocation4 + $0x8] sm:$0xff]
    %v25 = vlaneseq
    %v26 = vshrl.u32 %v25, 7
    %v27 = vlaneseq
    %v28 = vand.u32 %v27, 127
    %v29 = vadd.s32 %v28, 128
    %v30 = vadd.s32 %v28, 256
    %v31 = vadd.s32 %v28, 384
    %v32 = vadd.s32 %v28, 512
    %v33 = vadd.s32 %v28, 640
    %v34 = vadd.s32 %v28, 768
    %v35 = vadd.s32 %v28, 896
    %s36 = smul.u32 0, 2048
    %v37 = vmul.u32 %v26, 1024
    %v38 = vstv %s36
    %v39 = vadd.s32 %v38, %v37
    %v40 = vadd.s32 %v39, %v28
    %v41 = vadd.s32 %v39, %v29
    %v42 = vadd.s32 %v39, %v30
    %v43 = vadd.s32 %v39, %v31
    %v44 = vadd.s32 %v39, %v32
    %v45 = vadd.s32 %v39, %v33
    %v46 = vadd.s32 %v39, %v34
    %v47 = vadd.s32 %v39, %v35
    %s48 = sld [smem:[#allocation3]]
    %s49 = smul.u32 %s48, 2654435769
    %v50 = vstv %s49
    %v51 = vadd.s32 %v40, %v50
    %v52 = vadd.s32 %v41, %v50
    %v53 = vadd.s32 %v42, %v50
    %v54 = vadd.s32 %v43, %v50
    %v55 = vadd.s32 %v44, %v50
    %v56 = vadd.s32 %v45, %v50
    %v57 = vadd.s32 %v46, %v50
    %v58 = vadd.s32 %v47, %v50
    %v59 = vshrl.u32 %v51, 16
    %v60 = vshrl.u32 %v52, 16
    %v61 = vshrl.u32 %v53, 16
    %v62 = vshrl.u32 %v54, 16
    %v63 = vshrl.u32 %v55, 16
    %v64 = vshrl.u32 %v56, 16
    %v65 = vshrl.u32 %v57, 16
    %v66 = vshrl.u32 %v58, 16
    %v67 = vxor.u32 %v51, %v59
    %v68 = vxor.u32 %v52, %v60
    %v69 = vxor.u32 %v53, %v61
    %v70 = vxor.u32 %v54, %v62
    %v71 = vxor.u32 %v55, %v63
    %v72 = vxor.u32 %v56, %v64
    %v73 = vxor.u32 %v57, %v65
    %v74 = vxor.u32 %v58, %v66
    %v75 = vmul.u32 %v67, 2146121005
    %v76 = vmul.u32 %v68, 2146121005
    %v77 = vmul.u32 %v69, 2146121005
    %v78 = vmul.u32 %v70, 2146121005
    %v79 = vmul.u32 %v71, 2146121005
    %v80 = vmul.u32 %v72, 2146121005
    %v81 = vmul.u32 %v73, 2146121005
    %v82 = vmul.u32 %v74, 2146121005
    %v83 = vshrl.u32 %v75, 15
    %v84 = vshrl.u32 %v76, 15
    %v85 = vshrl.u32 %v77, 15
    %v86 = vshrl.u32 %v78, 15
    %v87 = vshrl.u32 %v79, 15
    %v88 = vshrl.u32 %v80, 15
    %v89 = vshrl.u32 %v81, 15
    %v90 = vshrl.u32 %v82, 15
    %v91 = vxor.u32 %v75, %v83
    %v92 = vxor.u32 %v76, %v84
    %v93 = vxor.u32 %v77, %v85
    %v94 = vxor.u32 %v78, %v86
    %v95 = vxor.u32 %v79, %v87
    %v96 = vxor.u32 %v80, %v88
    %v97 = vxor.u32 %v81, %v89
    %v98 = vxor.u32 %v82, %v90
    %v99 = vmul.u32 %v91, 2221697675
    %v100 = vmul.u32 %v92, 2221697675
    %v101 = vmul.u32 %v93, 2221697675
    %v102 = vmul.u32 %v94, 2221697675
    %v103 = vmul.u32 %v95, 2221697675
    %v104 = vmul.u32 %v96, 2221697675
    %v105 = vmul.u32 %v97, 2221697675
    %v106 = vmul.u32 %v98, 2221697675
    %v107 = vshrl.u32 %v99, 16
    %v108 = vshrl.u32 %v100, 16
    %v109 = vshrl.u32 %v101, 16
    %v110 = vshrl.u32 %v102, 16
    %v111 = vshrl.u32 %v103, 16
    %v112 = vshrl.u32 %v104, 16
    %v113 = vshrl.u32 %v105, 16
    %v114 = vshrl.u32 %v106, 16
    %v115 = vxor.u32 %v99, %v107
    %v116 = vxor.u32 %v100, %v108
    %v117 = vxor.u32 %v101, %v109
    %v118 = vxor.u32 %v102, %v110
    %v119 = vxor.u32 %v103, %v111
    %v120 = vxor.u32 %v104, %v112
    %v121 = vxor.u32 %v105, %v113
    %v122 = vxor.u32 %v106, %v114
    %v123 = vand.u32 %v115, 2147483647
    %v124 = vand.u32 %v116, 2147483647
    %v125 = vand.u32 %v117, 2147483647
    %v126 = vand.u32 %v118, 2147483647
    %v127 = vand.u32 %v119, 2147483647
    %v128 = vand.u32 %v120, 2147483647
    %v129 = vand.u32 %v121, 2147483647
    %v130 = vand.u32 %v122, 2147483647
    %vm131 = vcmp.lt.s32.totalorder %v123, 429496730
    %vm132 = vcmp.lt.s32.totalorder %v124, 429496730
    %vm133 = vcmp.lt.s32.totalorder %v125, 429496730
    %vm134 = vcmp.lt.s32.totalorder %v126, 429496730
    %vm135 = vcmp.lt.s32.totalorder %v127, 429496730
    %vm136 = vcmp.lt.s32.totalorder %v128, 429496730
    %vm137 = vcmp.lt.s32.totalorder %v129, 429496730
    %vm138 = vcmp.lt.s32.totalorder %v130, 429496730
    %v141 = vcombine.high %v23, %v23
    %v143 = vunpack.c.l.s4 1983009808
    %v144 = vunpack.c.0.s8 %v143
    %v145 = vlaneseq
    %v146 = vshrl.u32 %v145, 7
    %v147 = vsub.s32 %v144, %v146
    %v148 = vrot.slane %v23, %v147
    %v150 = vunpack.c.l.s4 1983009808
    %v151 = vunpack.c.0.s8 %v150
    %v152 = vlaneseq
    %v153 = vshrl.u32 %v152, 7
    %v154 = vsub.s32 %v151, %v153
    %v155 = vrot.slane %v141, %v154
    %v156 = vcombine.high %v148, %v148
    %v157 = vcombine.high %v155, %v155
    %v158 = vcombine.high %v24, %v24
    %v160 = vunpack.c.l.s4 1983009808
    %v161 = vunpack.c.0.s8 %v160
    %v162 = vlaneseq
    %v163 = vshrl.u32 %v162, 7
    %v164 = vsub.s32 %v161, %v163
    %v165 = vrot.slane %v24, %v164
    %v167 = vunpack.c.l.s4 1983009808
    %v168 = vunpack.c.0.s8 %v167
    %v169 = vlaneseq
    %v170 = vshrl.u32 %v169, 7
    %v171 = vsub.s32 %v168, %v170
    %v172 = vrot.slane %v158, %v171
    %v173 = vcombine.high %v165, %v165
    %v174 = vcombine.high %v172, %v172
    %v183 = vsel %vm131, 0.0, %v148
    %v184 = vsel %vm132, 0.0, %v156
    %v185 = vsel %vm133, 0.0, %v155
    %v186 = vsel %vm134, 0.0, %v157
    %v187 = vsel %vm135, 0.0, %v165
    %v188 = vsel %vm136, 0.0, %v173
    %v189 = vsel %vm137, 0.0, %v172
    %v190 = vsel %vm138, 0.0, %v174
    %v199 = vcombine.low %v183, %v184
    %v200 = vcombine.low %v185, %v186
    %v202 = vunpack.c.l.s4 1983009808
    %v203 = vunpack.c.0.s8 %v202
    %v204 = vlaneseq
    %v205 = vshrl.u32 %v204, 7
    %v206 = vsub.s32 %v203, %v205
    %v207 = vrot.slane %v199, %v206
    %v209 = vunpack.c.l.s4 1983009808
    %v210 = vunpack.c.0.s8 %v209
    %v211 = vlaneseq
    %v212 = vshrl.u32 %v211, 7
    %v213 = vsub.s32 %v210, %v212
    %v214 = vrot.slane %v200, %v213
    %v215 = vcombine.low %v207, %v214
    %v216 = vcombine.low %v187, %v188
    %v217 = vcombine.low %v189, %v190
    %v219 = vunpack.c.l.s4 1983009808
    %v220 = vunpack.c.0.s8 %v219
    %v221 = vlaneseq
    %v222 = vshrl.u32 %v221, 7
    %v223 = vsub.s32 %v220, %v222
    %v224 = vrot.slane %v216, %v223
    %v226 = vunpack.c.l.s4 1983009808
    %v227 = vunpack.c.0.s8 %v226
    %v228 = vlaneseq
    %v229 = vshrl.u32 %v228, 7
    %v230 = vsub.s32 %v227, %v229
    %v231 = vrot.slane %v217, %v230
    %v232 = vcombine.low %v224, %v231
    %235 = vst [vmem:[#allocation7] sm:$0xff] %v215
    %236 = vst [vmem:[#allocation7 + $0x8] sm:$0xff] %v232
    // Predicated region
    $region10: #{tpu_custom_call.1} parent=1 // pred_check
      _
    $region11: #{tpu_custom_call.1} parent=1 // pred_check_branch
      %238 = sbr.rel (0) target = $region13
    $region12: #{tpu_custom_call.1} parent=1 // pred_region
      %s240 = ssub.s32 256, 256
      %241 = vsyncadd [#allocation6], %s240
      %s243 = sshll.u32 [#allocation7], 4
      %s244 = int_to_ptr.vmem [resolvable:$true] %s243
      %246 = dma.vmem_to_hbm [thread:$0]  %s244, 256, %s2, [#allocation6]
    $region13: #{tpu_custom_call.1} parent=1 // pred_fallthru
      _
    // Predicated region
    $region14: #{tpu_custom_call.1} parent=1 // pred_check
      _
    $region15: #{tpu_custom_call.1} parent=1 // pred_check_branch
      %248 = sbr.rel (0) target = $region17
    $region16: #{tpu_custom_call.1} parent=1 // pred_region
      %249 = dma.done [#allocation6], 256
    $region17: #{tpu_custom_call.1} parent=1 // pred_fallthru
      _
    %250 = vsyncpa [#allocation5], 1
    %251 = vsyncpa [#allocation6], 1

</llo_original>
